<compile_context>
chip_gen: v5e
topology: v5e:2x2
jax: 0.10.0
libtpu: 0.0.40
codegen_flags: <defaults>
</compile_context>

<pallas_src>
import functools

import jax
import jax.numpy as jnp
import numpy as np
from jax import lax
from jax.experimental import pallas as pl
from jax.experimental.pallas import tpu as pltpu

EPS = 1e-5


# ---------------------------------------------------------------------------
# VMEM budgeting (generation aware)
# ---------------------------------------------------------------------------
def _vmem_capacity_bytes():
    try:
        return int(pltpu.get_tpu_info().vmem_capacity_bytes)
    except Exception:
        pass
    try:
        kind = jax.devices()[0].device_kind.lower()
        if "v7" in kind:
            return 64 * 1024 * 1024
        if any(t in kind for t in ("v4", "v5", "v6")):
            return 128 * 1024 * 1024
    except Exception:
        pass
    return 64 * 1024 * 1024          # conservative (v7x-sized) default


def _budgets():
    cap = _vmem_capacity_bytes()
    # Tile-picking budget: ~80% of physical minus headroom for Mosaic internal
    # scratch, the (2, td) gamma/beta block and the tiny stats scratch.
    budget = cap * 4 // 5 - (4 << 20)
    vmem_limit = int(cap * 9 // 10)
    return budget, vmem_limit


# ---------------------------------------------------------------------------
# Tile planning
# ---------------------------------------------------------------------------
def _largest_aligned_divisor(n, upper, align=8):
    """Largest divisor of n that is a multiple of `align` and <= upper (or None)."""
    upper = min(upper, n)
    best = None
    i = 1
    while i * i <= n:
        if n % i == 0:
            for d in (i, n // i):
                if d <= upper and d % align == 0 and (best is None or d > best):
                    best = d
        i += 1
    return best


def _feat_tile(d_f):
    # Prefer the smallest 128-aligned feature tile: a long feature grid keeps
    # input DMA / compute / output writeback pipelined and gives megacore a
    # parallel axis.  Blocks stay multi-KiB..MiB, so per-step overhead is noise.
    return 128 if d_f % 128 == 0 else d_f


def _plan_resident(n_rows, d_f, budget, max_row_tile_bytes):
    """(td, tn) for the single-HBM-read kernel, or None if the full point
    column (double buffered) + per-row-tile working set does not fit VMEM."""
    td = _feat_tile(d_f)
    x_block = n_rows * td * 4
    fixed = 2 * x_block + (1 << 20)          # x double-buffered across feature steps
    if fixed > budget:
        return None
    # Per row tile: 2 output buffers + ~4 chunk-sized f32 temporaries.
    per_tile = (budget - fixed) // 6
    cap_bytes = min(8 << 20, per_tile)
    if max_row_tile_bytes is not None:
        cap_bytes = min(cap_bytes, max_row_tile_bytes)
    tn = _largest_aligned_divisor(n_rows, max(8, cap_bytes // (td * 4)), 8)
    if tn is None:
        return None
    return td, tn


def _plan_streaming(n_rows, d_f, budget, max_row_tile_bytes):
    td = _feat_tile(d_f)
    cap_bytes = min(8 << 20, budget // 8)    # 2 in + 2 out buffers + temporaries
    if max_row_tile_bytes is not None:
        cap_bytes = min(cap_bytes, max_row_tile_bytes)
    tn = _largest_aligned_divisor(n_rows, max(8, cap_bytes // (td * 4)), 8)
    if tn is None:                           # n_rows is 8-aligned after padding
        tn = 8 if n_rows % 8 == 0 else n_rows
    return td, tn


# ---------------------------------------------------------------------------
# In-kernel helpers
# ---------------------------------------------------------------------------
def _reduce_groups(col, fold):
    """col: (1, fold*D) per-folded-column partial sums.  Summing circular lane
    rolls by g*D (g=1..fold-1) both reduces over the fold groups and broadcasts
    the per-feature total back to every folded position (cheap XLU rolls)."""
    if fold <= 1:
        return col
    d = col.shape[-1] // fold
    tot = col
    for g in range(1, fold):
        tot = tot + pltpu.roll(col, shift=g * d, axis=1)
    return tot


# ---------------------------------------------------------------------------
# Kernels
# ---------------------------------------------------------------------------
def _bn_resident_kernel(x_ref, gb_ref, o_ref, scale_ref, shift_ref,
                        *, n_valid, n_pad, fold, tn):
    """grid = (feat_tiles, row_tiles).  The x block (n_rows, td) has an
    index_map constant along the row axis, so it is fetched from HBM once per
    feature tile and stays resident; stats are computed once at row step 0
    (two-pass variance over the resident block, chunk-sized temporaries), then
    every row step normalizes one (tn, td) chunk so the output writeback is
    pipelined against the VPU work and the next feature tile's fetch."""
    r = pl.program_id(1)
    td = x_ref.shape[1]

    @pl.when(r == 0)
    def _():
        n_rows = x_ref.shape[0]
        nr = n_rows // tn
        inv_n = 1.0 / n_valid

        def _sum_body(i, acc):
            c = x_ref[pl.ds(pl.multiple_of(i * tn, 8), tn), :].astype(jnp.float32)
            return acc + jnp.sum(c, axis=0, keepdims=True)

        col_sum = lax.fori_loop(0, nr, _sum_body,
                                jnp.zeros((1, td), jnp.float32))
        mean = _reduce_groups(col_sum, fold) * inv_n

        def _sq_body(i, acc):
            c = x_ref[pl.ds(pl.multiple_of(i * tn, 8), tn), :].astype(jnp.float32)
            c = c - mean
            return acc + jnp.sum(c * c, axis=0, keepdims=True)

        col_sq = lax.fori_loop(0, nr, _sq_body,
                               jnp.zeros((1, td), jnp.float32))
        # Zero-padded rows contribute mean^2 each to col_sq; subtract exactly.
        var = (_reduce_groups(col_sq, fold) - n_pad * mean * mean) * inv_n
        scale = gb_ref[0:1, :] * lax.rsqrt(var + EPS)
        scale_ref[...] = scale
        shift_ref[...] = gb_ref[1:2, :] - mean * scale

    xr = x_ref[pl.ds(pl.multiple_of(r * tn, 8), tn), :].astype(jnp.float32)
    o_ref[...] = (xr * scale_ref[...] + shift_ref[...]).astype(o_ref.dtype)


def _bn_streaming_kernel(x_ref, gb_ref, o_ref,
                         sum_ref, sumsq_ref, shift0_ref, scale_ref, offs_ref,
                         *, n_valid, n_pad, fold, rows_per_tile):
    """Fallback when the full point column does not fit VMEM.
    grid = (feat_tiles, 2 phases, row_tiles): phase 0 streams row tiles and
    accumulates per-feature sum and SHIFTED sum of squares (shift = first row
    tile's mean, so var = E[(x-s)^2] - (mean-s)^2 does not cancel); phase 1
    streams again and applies the precomputed scale/offset.  2R + 1W of x."""
    p = pl.program_id(1)
    r = pl.program_id(2)

    @pl.when(p == 0)
    def _():
        x = x_ref[...].astype(jnp.float32)
        s = jnp.sum(x, axis=0, keepdims=True)

        @pl.when(r == 0)
        def _():
            shift0_ref[...] = _reduce_groups(s, fold) * (1.0 / rows_per_tile)
            sum_ref[...] = jnp.zeros_like(sum_ref)
            sumsq_ref[...] = jnp.zeros_like(sumsq_ref)

        d = x - shift0_ref[...]
        sum_ref[...] += s
        sumsq_ref[...] += jnp.sum(d * d, axis=0, keepdims=True)

    @pl.when((p == 1) & (r == 0))
    def _():
        inv_n = 1.0 / n_valid
        shift = shift0_ref[...]
        mean = _reduce_groups(sum_ref[...], fold) * inv_n
        # Zero-padded rows contribute shift^2 each to the shifted sum of squares.
        msq = (_reduce_groups(sumsq_ref[...], fold)
               - n_pad * shift * shift) * inv_n
        var = msq - (mean - shift) * (mean - shift)
        scale = gb_ref[0:1, :] * lax.rsqrt(var + EPS)
        scale_ref[...] = scale
        offs_ref[...] = gb_ref[1:2, :] - mean * scale

    @pl.when(p == 1)
    def _():
        x = x_ref[...].astype(jnp.float32)
        o_ref[...] = (x * scale_ref[...] + offs_ref[...]).astype(o_ref.dtype)


def _bias_kernel(x_ref, b_ref, o_ref):
    o_ref[...] = (x_ref[...] + b_ref[...]).astype(o_ref.dtype)


# ---------------------------------------------------------------------------
# Wrapper
# ---------------------------------------------------------------------------
def batch_norm_block(x, gamma, beta, bias, *, use_bn,
                     force_streaming=False, max_row_tile_bytes=None):
    """Pallas implementation of BatchNormBlock.forward.

    x:     (N, D) float32   (num_points, in_dim)
    gamma: (1, D) / (D,)    BN weight
    beta:  (1, D) / (D,)    BN bias
    bias:  (1, D) / (D,)    used only when use_bn=False
    """
    x = jnp.asarray(x)
    N, D = x.shape
    budget, vmem_limit = _budgets()

    # Lane folding (D < 128 -> 128-lane-dense layout) + zero row padding so the
    # folded row count is always a multiple of 8 and folding stays active for
    # arbitrary point counts.  Stats divide by the true N with exact padding
    # corrections; padded output rows are cropped.
    fold = 128 // D if (D < 128 and 128 % D == 0) else 1
    align = 8 * fold
    n_pad = (-N) % align
    if n_pad:
        x = jnp.pad(x, ((0, n_pad), (0, 0)))
    n_total = N + n_pad
    n_rows = n_total // fold
    d_f = D * fold
    x_f = x.reshape(n_rows, d_f)

    # ----------------------- use_bn=False: x + bias -------------------------
    if not use_bn:
        bias_f = jnp.tile(jnp.asarray(bias, jnp.float32).reshape(1, D), (1, fold))
        td, tn = _plan_streaming(n_rows, d_f, budget, max_row_tile_bytes)
        out = pl.pallas_call(
            _bias_kernel,
            out_shape=jax.ShapeDtypeStruct((n_rows, d_f), x.dtype),
            grid_spec=pltpu.PrefetchScalarGridSpec(
                num_scalar_prefetch=0,
                grid=(d_f // td, n_rows // tn),
                in_specs=[
                    pl.BlockSpec((tn, td), lambda j, r: (r, j)),
                    pl.BlockSpec((1, td), lambda j, r: (0, j)),
                ],
                out_specs=pl.BlockSpec((tn, td), lambda j, r: (r, j)),
            ),
            compiler_params=pltpu.CompilerParams(
                dimension_semantics=("parallel", "parallel"),
                vmem_limit_bytes=vmem_limit),
        )(x_f, bias_f)
        return out.reshape(n_total, D)[:N]

    # ------------------------------ use_bn=True -----------------------------
    gamma_f = jnp.tile(jnp.asarray(gamma, jnp.float32).reshape(1, D), (1, fold))
    beta_f = jnp.tile(jnp.asarray(beta, jnp.float32).reshape(1, D), (1, fold))
    gb_f = jnp.concatenate([gamma_f, beta_f], axis=0)        # (2, d_f)

    plan = None if force_streaming else _plan_resident(
        n_rows, d_f, budget, max_row_tile_bytes)

    if plan is not None:
        td, tn = plan
        kernel = functools.partial(_bn_resident_kernel,
                                   n_valid=float(N), n_pad=float(n_pad),
                                   fold=fold, tn=tn)
        out = pl.pallas_call(
            kernel,
            out_shape=jax.ShapeDtypeStruct((n_rows, d_f), x.dtype),
            grid_spec=pltpu.PrefetchScalarGridSpec(
                num_scalar_prefetch=0,
                grid=(d_f // td, n_rows // tn),
                in_specs=[
                    # Full point column; index_map constant along the row axis
                    # -> fetched once per feature tile, resident across r.
                    pl.BlockSpec((n_rows, td), lambda j, r: (0, j)),
                    pl.BlockSpec((2, td), lambda j, r: (0, j)),
                ],
                out_specs=pl.BlockSpec((tn, td), lambda j, r: (r, j)),
                scratch_shapes=[pltpu.VMEM((1, td), jnp.float32)] * 2,
            ),
            compiler_params=pltpu.CompilerParams(
                dimension_semantics=("parallel", "arbitrary"),
                vmem_limit_bytes=vmem_limit),
        )(x_f, gb_f)
        return out.reshape(n_total, D)[:N]

    # Streaming fallback: one pallas_call, stats in VMEM scratch.
    td, tn = _plan_streaming(n_rows, d_f, budget, max_row_tile_bytes)
    kernel = functools.partial(_bn_streaming_kernel,
                               n_valid=float(N), n_pad=float(n_pad),
                               fold=fold, rows_per_tile=float(tn * fold))
    out = pl.pallas_call(
        kernel,
        out_shape=jax.ShapeDtypeStruct((n_rows, d_f), x.dtype),
        grid_spec=pltpu.PrefetchScalarGridSpec(
            num_scalar_prefetch=0,
            grid=(d_f // td, 2, n_rows // tn),
            in_specs=[
                pl.BlockSpec((tn, td), lambda j, p, r: (r, j)),
                pl.BlockSpec((2, td), lambda j, p, r: (0, j)),
            ],
            # During the stats phase (p==0) the output block index stays pinned
            # at (0, j) and is never written; Pallas only flushes an output
            # block when its index changes, so nothing is written back until
            # phase 1 fills it.  (Documented as relying on current semantics.)
            out_specs=pl.BlockSpec((tn, td), lambda j, p, r: (r * p, j)),
            scratch_shapes=[pltpu.VMEM((1, td), jnp.float32)] * 5,
        ),
        compiler_params=pltpu.CompilerParams(
            dimension_semantics=("parallel", "arbitrary", "arbitrary"),
            vmem_limit_bytes=vmem_limit),
    )(x_f, gb_f)
    return out.reshape(n_total, D)[:N]


# ---------------------------------------------------------------------------
# Self-test
# ---------------------------------------------------------------------------
if __name__ == "__main__":
    def bn_ref(xv, g, b):
        m = jnp.mean(xv, axis=0, keepdims=True)
        v = jnp.mean((xv - m) ** 2, axis=0, keepdims=True)
        return (xv - m) / jnp.sqrt(v + EPS) * g + b

    N, D = 256, 32   # (num_points, in_dim)
    key = jax.random.PRNGKey(0)
    kx, kg, kb, kbias = jax.random.split(key, 4)
    x = jax.random.normal(kx, (N, D), dtype=jnp.float32) * 2.0 + 0.5
    gamma = 1.0 + 0.1 * jax.random.normal(kg, (1, D), dtype=jnp.float32)
    beta = 0.1 * jax.random.normal(kb, (1, D), dtype=jnp.float32)
    bias = 0.1 * jax.random.normal(kbias, (1, D), dtype=jnp.float32)

    ref = bn_ref(x, gamma, beta)

    # 1) Default single-HBM-read path (resident column, pipelined writeback).
    out = jax.block_until_ready(batch_norm_block(x, gamma, beta, bias, use_bn=True))
    np.testing.assert_allclose(np.asarray(out), np.asarray(ref), rtol=1e-5, atol=1e-5)

    # 2) Same path, forced small row tiles -> multiple row steps exercised.
    out = jax.block_until_ready(
        batch_norm_block(x, gamma, beta, bias, use_bn=True,
                         max_row_tile_bytes=8 * 128 * 4))
    np.testing.assert_allclose(np.asarray(out), np.asarray(ref), rtol=1e-5, atol=1e-5)

    # 3) Non-aligned point count -> zero padding + exact stats correction.
    x2 = x[:250]
    ref2 = bn_ref(x2, gamma, beta)
    out2 = jax.block_until_ready(batch_norm_block(x2, gamma, beta, bias, use_bn=True))
    np.testing.assert_allclose(np.asarray(out2), np.asarray(ref2), rtol=1e-5, atol=1e-5)

    # 4) Streaming fallback (shift-stabilized variance), forced small tiles.
    out = jax.block_until_ready(
        batch_norm_block(x, gamma, beta, bias, use_bn=True,
                         force_streaming=True, max_row_tile_bytes=8 * 128 * 4))
    np.testing.assert_allclose(np.asarray(out), np.asarray(ref), rtol=1e-5, atol=1e-5)

    # 5) use_bn=False path: x + bias.
    out_b = jax.block_until_ready(batch_norm_block(x, gamma, beta, bias, use_bn=False))
    np.testing.assert_allclose(np.asarray(out_b), np.asarray(x + bias),
                               rtol=1e-6, atol=1e-6)

    print("KERNEL_OK")
</pallas_src>

<mosaic_0001>
module attributes {stable_mosaic.version = 11 : i64} {
  func.func @_bn_resident_kernel(%arg0: i32, %arg1: i32, %arg2: memref<64x128xf32, #tpu.memory_space<vmem>>, %arg3: memref<2x128xf32, #tpu.memory_space<vmem>>, %arg4: memref<64x128xf32, #tpu.memory_space<vmem>>, %arg5: memref<1x128xf32, #tpu.memory_space<vmem>>, %arg6: memref<1x128xf32, #tpu.memory_space<vmem>>) attributes {dimension_semantics = [#tpu.dimension_semantics<parallel>, #tpu.dimension_semantics<arbitrary>], iteration_bounds = array<i64: 1, 1>, scalar_prefetch = 0 : i64, scratch_operands = 2 : i64, tpu.core_type = #tpu.core_type<tc>, window_params = [{transform_indices = @transform_0, window_bounds = array<i64: 64, 128>}, {transform_indices = @transform_1, window_bounds = array<i64: 2, 128>}, {transform_indices = @transform_2, window_bounds = array<i64: 64, 128>}]} {
    %c0_i32 = arith.constant 0 : i32
    %0 = arith.cmpi eq, %arg1, %c0_i32 : i32
    %1 = arith.extui %0 : i1 to i32
    %c0_i32_0 = arith.constant 0 : i32
    %2 = arith.cmpi ne, %1, %c0_i32_0 : i32
    scf.if %2 {
      %cst = arith.constant 0.000000e+00 : f32
      %14 = vector.broadcast %cst : f32 to vector<1x128xf32>
      %c0_i32_7 = arith.constant 0 : i32
      %c64_i32_8 = arith.constant 64 : i32
      %15 = arith.muli %c0_i32_7, %c64_i32_8 : i32
      %16 = tpu.assume_multiple %15, 8 : i32
      %17 = arith.index_cast %16 : i32 to index
      %c0_9 = arith.constant 0 : index
      %18 = vector.load %arg2[%17, %c0_9] : memref<64x128xf32, #tpu.memory_space<vmem>>, vector<64x128xf32>
      %cst_10 = arith.constant dense<0.000000e+00> : vector<128xf32>
      %19 = vector.multi_reduction <add>, %18, %cst_10 [0] : vector<64x128xf32> to vector<128xf32>
      %20 = vector.shape_cast %19 : vector<128xf32> to vector<1x128xf32>
      %21 = arith.addf %14, %20 : vector<1x128xf32>
      %c1_i32 = arith.constant 1 : i32
      %c32_i32 = arith.constant 32 : i32
      %22 = tpu.dynamic_rotate %21 by %c32_i32 dim 1 : vector<1x128xf32>, i32 -> vector<1x128xf32>
      %23 = arith.addf %21, %22 : vector<1x128xf32>
      %c64_i32_11 = arith.constant 64 : i32
      %24 = tpu.dynamic_rotate %21 by %c64_i32_11 dim 1 : vector<1x128xf32>, i32 -> vector<1x128xf32>
      %25 = arith.addf %23, %24 : vector<1x128xf32>
      %c96_i32 = arith.constant 96 : i32
      %26 = tpu.dynamic_rotate %21 by %c96_i32 dim 1 : vector<1x128xf32>, i32 -> vector<1x128xf32>
      %27 = arith.addf %25, %26 : vector<1x128xf32>
      %cst_12 = arith.constant 3.906250e-03 : f32
      %28 = vector.broadcast %cst_12 : f32 to vector<1x128xf32>
      %29 = arith.mulf %27, %28 : vector<1x128xf32>
      %cst_13 = arith.constant 0.000000e+00 : f32
      %30 = vector.broadcast %cst_13 : f32 to vector<1x128xf32>
      %c0_i32_14 = arith.constant 0 : i32
      %c64_i32_15 = arith.constant 64 : i32
      %31 = arith.muli %c0_i32_14, %c64_i32_15 : i32
      %32 = tpu.assume_multiple %31, 8 : i32
      %33 = arith.index_cast %32 : i32 to index
      %c0_16 = arith.constant 0 : index
      %34 = vector.load %arg2[%33, %c0_16] : memref<64x128xf32, #tpu.memory_space<vmem>>, vector<64x128xf32>
      %35 = vector.broadcast %29 : vector<1x128xf32> to vector<64x128xf32>
      %36 = arith.subf %34, %35 : vector<64x128xf32>
      %37 = arith.mulf %36, %36 : vector<64x128xf32>
      %cst_17 = arith.constant dense<0.000000e+00> : vector<128xf32>
      %38 = vector.multi_reduction <add>, %37, %cst_17 [0] : vector<64x128xf32> to vector<128xf32>
      %39 = vector.shape_cast %38 : vector<128xf32> to vector<1x128xf32>
      %40 = arith.addf %30, %39 : vector<1x128xf32>
      %c1_i32_18 = arith.constant 1 : i32
      %c32_i32_19 = arith.constant 32 : i32
      %41 = tpu.dynamic_rotate %40 by %c32_i32_19 dim 1 : vector<1x128xf32>, i32 -> vector<1x128xf32>
      %42 = arith.addf %40, %41 : vector<1x128xf32>
      %c64_i32_20 = arith.constant 64 : i32
      %43 = tpu.dynamic_rotate %40 by %c64_i32_20 dim 1 : vector<1x128xf32>, i32 -> vector<1x128xf32>
      %44 = arith.addf %42, %43 : vector<1x128xf32>
      %c96_i32_21 = arith.constant 96 : i32
      %45 = tpu.dynamic_rotate %40 by %c96_i32_21 dim 1 : vector<1x128xf32>, i32 -> vector<1x128xf32>
      %46 = arith.addf %44, %45 : vector<1x128xf32>
      %cst_22 = arith.constant 0.000000e+00 : f32
      %47 = vector.broadcast %cst_22 : f32 to vector<1x128xf32>
      %48 = arith.mulf %47, %29 : vector<1x128xf32>
      %49 = arith.mulf %48, %29 : vector<1x128xf32>
      %50 = arith.subf %46, %49 : vector<1x128xf32>
      %cst_23 = arith.constant 3.906250e-03 : f32
      %51 = vector.broadcast %cst_23 : f32 to vector<1x128xf32>
      %52 = arith.mulf %50, %51 : vector<1x128xf32>
      %c0_24 = arith.constant 0 : index
      %c0_25 = arith.constant 0 : index
      %53 = vector.load %arg3[%c0_24, %c0_25] : memref<2x128xf32, #tpu.memory_space<vmem>>, vector<1x128xf32>
      %cst_26 = arith.constant 9.99999974E-6 : f32
      %54 = vector.broadcast %cst_26 : f32 to vector<1x128xf32>
      %55 = arith.addf %52, %54 : vector<1x128xf32>
      %56 = math.rsqrt %55 : vector<1x128xf32>
      %57 = arith.mulf %53, %56 : vector<1x128xf32>
      %c0_27 = arith.constant 0 : index
      %c0_28 = arith.constant 0 : index
      %58 = vector.load %arg5[%c0_27, %c0_28] : memref<1x128xf32, #tpu.memory_space<vmem>>, vector<1x128xf32>
      tpu.vector_store %arg5[%c0_27, %c0_28], %57 {strides = array<i32>} : memref<1x128xf32, #tpu.memory_space<vmem>>, vector<1x128xf32>,
      %c1 = arith.constant 1 : index
      %c0_29 = arith.constant 0 : index
      %59 = vector.load %arg3[%c1, %c0_29] : memref<2x128xf32, #tpu.memory_space<vmem>>, vector<1x128xf32>
      %60 = arith.mulf %29, %57 : vector<1x128xf32>
      %61 = arith.subf %59, %60 : vector<1x128xf32>
      %c0_30 = arith.constant 0 : index
      %c0_31 = arith.constant 0 : index
      %62 = vector.load %arg6[%c0_30, %c0_31] : memref<1x128xf32, #tpu.memory_space<vmem>>, vector<1x128xf32>
      tpu.vector_store %arg6[%c0_30, %c0_31], %61 {strides = array<i32>} : memref<1x128xf32, #tpu.memory_space<vmem>>, vector<1x128xf32>,
    } else {
    }
    %c64_i32 = arith.constant 64 : i32
    %3 = arith.muli %arg1, %c64_i32 : i32
    %4 = tpu.assume_multiple %3, 8 : i32
    %5 = arith.index_cast %4 : i32 to index
    %c0 = arith.constant 0 : index
    %6 = vector.load %arg2[%5, %c0] : memref<64x128xf32, #tpu.memory_space<vmem>>, vector<64x128xf32>
    %c0_1 = arith.constant 0 : index
    %c0_2 = arith.constant 0 : index
    %7 = vector.load %arg5[%c0_1, %c0_2] : memref<1x128xf32, #tpu.memory_space<vmem>>, vector<1x128xf32>
    %8 = vector.broadcast %7 : vector<1x128xf32> to vector<64x128xf32>
    %9 = arith.mulf %6, %8 : vector<64x128xf32>
    %c0_3 = arith.constant 0 : index
    %c0_4 = arith.constant 0 : index
    %10 = vector.load %arg6[%c0_3, %c0_4] : memref<1x128xf32, #tpu.memory_space<vmem>>, vector<1x128xf32>
    %11 = vector.broadcast %10 : vector<1x128xf32> to vector<64x128xf32>
    %12 = arith.addf %9, %11 : vector<64x128xf32>
    %c0_5 = arith.constant 0 : index
    %c0_6 = arith.constant 0 : index
    %13 = vector.load %arg4[%c0_5, %c0_6] : memref<64x128xf32, #tpu.memory_space<vmem>>, vector<64x128xf32>
    tpu.vector_store %arg4[%c0_5, %c0_6], %12 {strides = array<i32>} : memref<64x128xf32, #tpu.memory_space<vmem>>, vector<64x128xf32>,
    return
  }
  func.func @transform_0(%arg0: i32, %arg1: i32) -> (i32, i32) {
    %c0_i32 = arith.constant 0 : i32
    %c0_i32_0 = arith.constant 0 : i32
    return %c0_i32, %arg0 : i32, i32
  }
  func.func @transform_1(%arg0: i32, %arg1: i32) -> (i32, i32) {
    %c0_i32 = arith.constant 0 : i32
    %c0_i32_0 = arith.constant 0 : i32
    return %c0_i32, %arg0 : i32, i32
  }
  func.func @transform_2(%arg0: i32, %arg1: i32) -> (i32, i32) {
    %c0_i32 = arith.constant 0 : i32
    return %arg1, %arg0 : i32, i32
  }
}

</mosaic_0001>

<llo_original>
// kernel: tpu_custom_call.1
$region0: #{tpu_custom_call.1}
  #allocation0 [shape = 'u32[]', space=smem, size = 0x4, offset = 0x4, fixed_abs, tag = 'smem constant byte address 0x4 - core index']
  #allocation1 [shape = 'u32[72,128]{1,0:T(1,128)}', space=vmem, size = 0x9000, scoped, tag = 'internal scratch']
  #allocation2 [shape = 'f32[1,128]{1,0:T(1,128)}', space=vmem, size = 0x200, scoped, tag = 'scratch operand']
  #allocation3 [shape = 'f32[1,128]{1,0:T(1,128)}', space=vmem, size = 0x200, scoped, tag = 'scratch operand']
  %s0 = inlined_call_operand.hbm [shape: f32[64,128], index: 0, kind: input, shape index: {}]
  %s1 = inlined_call_operand.hbm [shape: f32[2,128], index: 1, kind: input, shape index: {}]
  %s2 = inlined_call_operand.hbm [shape: f32[64,128], index: 2, kind: output, shape index: {}]
  %s3 = sld [smem:[#allocation0]]
  $region30: #{tpu_custom_call.1} parent=0
    _
  %s5 = ssub.s32 1, %s3
  %s6 = scalar_select 0, %s5, %s3
  $region1: #{tpu_custom_call.1} parent=0
    #allocation4 [shape = 'u8[32768]{0}', space=vmem, size = 0x8000, scoped, tag = 'input window, operand 0, single buffered']
    #allocation5 [shape = 's32[1]{0}', space=sflag, size = 0x4, scoped, tag = 'scoped memory for tpu_custom_call.1']
    #allocation6 [shape = 's32[1]{0}', space=sflag, size = 0x4, scoped, tag = 'scoped memory for tpu_custom_call.1']
    #allocation7 [shape = 'u8[1024]{0}', space=vmem, size = 0x400, scoped, tag = 'input window, operand 1, single buffered']
    #allocation8 [shape = 's32[1]{0}', space=sflag, size = 0x4, scoped, tag = 'scoped memory for tpu_custom_call.1']
    #allocation9 [shape = 'u8[32768]{0}', space=vmem, size = 0x8000, scoped, tag = 'output window, operand 0, single buffered']
    %7 = vsyncpa [#allocation5], 0
    %8 = vsyncpa [#allocation8], 0
    %9 = vsyncpa [#allocation6], 0
    // Predicated region
    $region2: #{tpu_custom_call.1} parent=1 // pred_check
      _
    $region3: #{tpu_custom_call.1} parent=1 // pred_check_branch
      %11 = sbr.rel (0) target = $region5
    $region4: #{tpu_custom_call.1} parent=1 // pred_region
      %13 = vsyncadd [#allocation5], 0
      %s14 = sshll.u32 %s0, 4
      %s15 = int_to_ptr.hbm [resolvable:$true] %s14
      %s16 = sshll.u32 [#allocation4], 4
      %s17 = int_to_ptr.vmem [resolvable:$true] %s16
      %22 = dma.hbm_to_vmem [thread:$0]  %s15, 1024, %s17, [#allocation5], 128, 128, 8
    $region5: #{tpu_custom_call.1} parent=1 // pred_fallthru
      _
    // Predicated region
    $region6: #{tpu_custom_call.1} parent=1 // pred_check
      _
    $region7: #{tpu_custom_call.1} parent=1 // pred_check_branch
      %24 = sbr.rel (0) target = $region9
    $region8: #{tpu_custom_call.1} parent=1 // pred_region
      %26 = vsyncadd [#allocation8], 0
      %s28 = sshll.u32 %s1, 4
      %s29 = int_to_ptr.hbm [resolvable:$true] %s28
      %s30 = sshll.u32 [#allocation7], 4
      %s31 = int_to_ptr.vmem [resolvable:$true] %s30
      %33 = dma.hbm_to_vmem [thread:$0]  %s29, 32, %s31, [#allocation8]
    $region9: #{tpu_custom_call.1} parent=1 // pred_fallthru
      _
    // Predicated region
    $region10: #{tpu_custom_call.1} parent=1 // pred_check
      _
    $region11: #{tpu_custom_call.1} parent=1 // pred_check_branch
      %35 = sbr.rel (0) target = $region13
    $region12: #{tpu_custom_call.1} parent=1 // pred_region
      %37 = dma.done [#allocation5], 1024
    $region13: #{tpu_custom_call.1} parent=1 // pred_fallthru
      _
    // Predicated region
    $region14: #{tpu_custom_call.1} parent=1 // pred_check
      _
    $region15: #{tpu_custom_call.1} parent=1 // pred_check_branch
      %39 = sbr.rel (0) target = $region17
    $region16: #{tpu_custom_call.1} parent=1 // pred_region
      %41 = dma.done [#allocation8], 32
    $region17: #{tpu_custom_call.1} parent=1 // pred_fallthru
      _
    %p42 = scmp.eq.s32.totalorder 0, 0
    // Predicated region
    $region18: #{tpu_custom_call.1} parent=1 // pred_check
      %p43 = pneg %p42
    $region19: #{tpu_custom_call.1} parent=1 // pred_check_branch
      %45 = sbr.rel (%p43) target = $region21
    $region20: #{tpu_custom_call.1} parent=1 // pred_region
      %v46 = vld [vmem:[#allocation4] sm:$0xff]
      %v47 = vld [vmem:[#allocation4 + $0x8] sm:$0xff]
      %v48 = vld [vmem:[#allocation4 + $0x10] sm:$0xff]
      %v49 = vld [vmem:[#allocation4 + $0x18] sm:$0xff]
      %v50 = vld [vmem:[#allocation4 + $0x20] sm:$0xff]
      %v51 = vld [vmem:[#allocation4 + $0x28] sm:$0xff]
      %v52 = vld [vmem:[#allocation4 + $0x30] sm:$0xff]
      %v53 = vld [vmem:[#allocation4 + $0x38] sm:$0xff]
      %v54 = vadd.f32 %v46, %v47
      %v55 = vadd.f32 %v54, %v48
      %v56 = vadd.f32 %v55, %v49
      %v57 = vadd.f32 %v56, %v50
      %v58 = vadd.f32 %v57, %v51
      %v59 = vadd.f32 %v58, %v52
      %v60 = vadd.f32 %v59, %v53
      %v61 = vrot.slane %v60, 4
      %v62 = vadd.f32 %v60, %v61
      %v63 = vrot.slane %v62, 2
      %v64 = vadd.f32 %v62, %v63
      %v65 = vrot.slane %v64, 1
      %v66 = vadd.f32 %v64, %v65
      %v67 = vadd.f32 %v66, 0.0
      %68 = vrot.lane.b32.xlu0 %v67, 32
      %v69 = vpop.permute.xlu0 %68
      %v70 = vadd.f32 %v67, %v69
      %71 = vrot.lane.b32.xlu0 %v67, 64
      %v72 = vpop.permute.xlu0 %71
      %v73 = vadd.f32 %v70, %v72
      %74 = vrot.lane.b32.xlu0 %v67, 96
      %v75 = vpop.permute.xlu0 %74
      %v76 = vadd.f32 %v73, %v75
      %v77 = vmul.f32 %v76, 0.00390625
      %v78 = vperm.slane %v77, 0
      %v79 = vsub.f32 %v46, %v78
      %v80 = vsub.f32 %v47, %v78
      %v81 = vsub.f32 %v48, %v78
      %v82 = vsub.f32 %v49, %v78
      %v83 = vsub.f32 %v50, %v78
      %v84 = vsub.f32 %v51, %v78
      %v85 = vsub.f32 %v52, %v78
      %v86 = vsub.f32 %v53, %v78
      %v87 = vmul.f32 %v79, %v79
      %v88 = vmul.f32 %v80, %v80
      %v89 = vmul.f32 %v81, %v81
      %v90 = vmul.f32 %v82, %v82
      %v91 = vmul.f32 %v83, %v83
      %v92 = vmul.f32 %v84, %v84
      %v93 = vmul.f32 %v85, %v85
      %v94 = vmul.f32 %v86, %v86
      %v95 = vadd.f32 %v87, %v88
      %v96 = vadd.f32 %v95, %v89
      %v97 = vadd.f32 %v96, %v90
      %v98 = vadd.f32 %v97, %v91
      %v99 = vadd.f32 %v98, %v92
      %v100 = vadd.f32 %v99, %v93
      %v101 = vadd.f32 %v100, %v94
      %v102 = vrot.slane %v101, 4
      %v103 = vadd.f32 %v101, %v102
      %v104 = vrot.slane %v103, 2
      %v105 = vadd.f32 %v103, %v104
      %v106 = vrot.slane %v105, 1
      %v107 = vadd.f32 %v105, %v106
      %v108 = vadd.f32 %v107, 0.0
      %109 = vrot.lane.b32.xlu0 %v108, 32
      %v110 = vpop.permute.xlu0 %109
      %v111 = vadd.f32 %v108, %v110
      %112 = vrot.lane.b32.xlu0 %v108, 64
      %v113 = vpop.permute.xlu0 %112
      %v114 = vadd.f32 %v111, %v113
      %115 = vrot.lane.b32.xlu0 %v108, 96
      %v116 = vpop.permute.xlu0 %115
      %v117 = vadd.f32 %v114, %v116
      %v118 = vmul.f32 %v77, 0.0
      %v119 = vmul.f32 %v118, %v77
      %v120 = vsub.f32 %v117, %v119
      %v121 = vmul.f32 %v120, 0.00390625
      %v122 = vld [vmem:[#allocation7] sm:$0x1]
      %v123 = vadd.f32 %v121, 1e-05
      %v124 = vrsqrt.pop %v123
      %v125 = vmul.f32 %v124, %v123
      %v126 = vmul.f32 %v125, %v124
      %v127 = vmul.f32 0.5, %v126
      %v128 = vsub.f32 1.5, %v127
      %v129 = vmul.f32 %v124, %v128
      %vm130 = vweird.f32 %v123
      %vm131 = vweird.f32 %v124
      %vm132 = vmor %vm130, %vm131
      %v133 = vsel %vm132, %v124, %v129
      %v134 = vmul.f32 %v122, %v133
      %135 = vst [vmem:[#allocation2] sm:$0x1] %v134
      %v136 = vld [vmem:[#allocation7 + $0x1] sm:$0x1]
      %v137 = vmul.f32 %v77, %v134
      %v138 = vsub.f32 %v136, %v137
      %139 = vst [vmem:[#allocation3] sm:$0x1] %v138
    $region21: #{tpu_custom_call.1} parent=1 // pred_fallthru
      _
    %s140 = smul.u32 0, 64
    %s141 = scalar_lea.vmem [#allocation4], %s140
    %v142 = vld [vmem:[%s141] sm:$0xff]
    %v143 = vld [vmem:[%s141 + $0x8] sm:$0xff]
    %v144 = vld [vmem:[%s141 + $0x10] sm:$0xff]
    %v145 = vld [vmem:[%s141 + $0x18] sm:$0xff]
    %v146 = vld [vmem:[%s141 + $0x20] sm:$0xff]
    %v147 = vld [vmem:[%s141 + $0x28] sm:$0xff]
    %v148 = vld [vmem:[%s141 + $0x30] sm:$0xff]
    %v149 = vld [vmem:[%s141 + $0x38] sm:$0xff]
    %v150 = vld [vmem:[#allocation2] sm:$0x1]
    %v152 = vperm.slane %v150, 0
    %v154 = vmul.f32 %v142, %v152
    %v155 = vmul.f32 %v143, %v152
    %v156 = vmul.f32 %v144, %v152
    %v157 = vmul.f32 %v145, %v152
    %v158 = vmul.f32 %v146, %v152
    %v159 = vmul.f32 %v147, %v152
    %v160 = vmul.f32 %v148, %v152
    %v161 = vmul.f32 %v149, %v152
    %v162 = vld [vmem:[#allocation3] sm:$0x1]
    %v164 = vperm.slane %v162, 0
    %v166 = vadd.f32 %v154, %v164
    %v167 = vadd.f32 %v155, %v164
    %v168 = vadd.f32 %v156, %v164
    %v169 = vadd.f32 %v157, %v164
    %v170 = vadd.f32 %v158, %v164
    %v171 = vadd.f32 %v159, %v164
    %v172 = vadd.f32 %v160, %v164
    %v173 = vadd.f32 %v161, %v164
    %174 = vst [vmem:[#allocation9] sm:$0xff] %v166
    %175 = vst [vmem:[#allocation9 + $0x8] sm:$0xff] %v167
    %176 = vst [vmem:[#allocation9 + $0x10] sm:$0xff] %v168
    %177 = vst [vmem:[#allocation9 + $0x18] sm:$0xff] %v169
    %178 = vst [vmem:[#allocation9 + $0x20] sm:$0xff] %v170
    %179 = vst [vmem:[#allocation9 + $0x28] sm:$0xff] %v171
    %180 = vst [vmem:[#allocation9 + $0x30] sm:$0xff] %v172
    %181 = vst [vmem:[#allocation9 + $0x38] sm:$0xff] %v173
    // Predicated region
    $region22: #{tpu_custom_call.1} parent=1 // pred_check
      _
    $region23: #{tpu_custom_call.1} parent=1 // pred_check_branch
      %183 = sbr.rel (0) target = $region25
    $region24: #{tpu_custom_call.1} parent=1 // pred_region
      %185 = vsyncadd [#allocation6], 0
      %s186 = sshll.u32 [#allocation9], 4
      %s187 = int_to_ptr.vmem [resolvable:$true] %s186
      %s188 = sshll.u32 %s2, 4
      %s189 = int_to_ptr.hbm [resolvable:$true] %s188
      %194 = dma.vmem_to_hbm [thread:$0]  %s187, 1024, %s189, [#allocation6], 128, 128, 8
    $region25: #{tpu_custom_call.1} parent=1 // pred_fallthru
      _
    // Predicated region
    $region26: #{tpu_custom_call.1} parent=1 // pred_check
      _
    $region27: #{tpu_custom_call.1} parent=1 // pred_check_branch
      %196 = sbr.rel (0) target = $region29
    $region28: #{tpu_custom_call.1} parent=1 // pred_region
      %198 = dma.done [#allocation6], 1024
    $region29: #{tpu_custom_call.1} parent=1 // pred_fallthru
      _
    %199 = vsyncpa [#allocation5], 1
    %200 = vsyncpa [#allocation8], 1
    %201 = vsyncpa [#allocation6], 1

</llo_original>
